<compile_context>
chip_gen: v6e
topology: v6e:2x2x1
jax: 0.10.0
libtpu: 0.0.40
codegen_flags: <defaults>
</compile_context>

<pallas_src>
import jax
import jax.numpy as jnp
from jax import lax
from jax.experimental import pallas as pl
from jax.experimental.pallas import tpu as pltpu

BN_EPS = 1e-5


def _wrb_kernel(x_ref, a1_ref, a2_ref, b1_ref, b2_ref, o_ref):
    """Fused wide-residual-block forward for one batch tile.

    x_ref  : (Nb, H, W*Cin)         input activations (lanes = W*Cin), f32
    a1_ref : (W*Cin,  3*W*Cout)     conv1 row matrices (BN1 scale folded in), bf16
    a2_ref : (W*Cout, 3*W*Cout)     conv2 row matrices (BN2 scale folded in), bf16
    b1_ref, b2_ref : (1, W*Cout)    folded BatchNorm biases (tiled over W), f32
    o_ref  : (Nb, H, W*Cout)        output activations, f32
    """
    nb, h, wc_in = x_ref.shape
    wc_out = o_ref.shape[-1]
    m = nb * h

    x2 = x_ref[...].reshape(m, wc_in)            # f32; reused for the residual add
    x2_bf = x2.astype(jnp.bfloat16)

    # Row index within each image (m rows = nb images x h rows each); masks are shared
    # by both convolutions.
    row = lax.broadcasted_iota(jnp.int32, (m, wc_out), 0)
    h_in_img = row % h
    is_top = h_in_img == 0
    is_bot = h_in_img == (h - 1)

    def conv3x3(inp_bf, a_ref):
        # One MXU matmul: columns [0:wc_out) = kernel row 0 (halo from the row above),
        # [wc_out:2*wc_out) = kernel row 1 (same row), [2*wc_out:) = kernel row 2 (below).
        t = jnp.dot(inp_bf, a_ref[...], preferred_element_type=jnp.float32)
        t_m1 = t[:, 0:wc_out]
        t_0 = t[:, wc_out:2 * wc_out]
        t_p1 = t[:, 2 * wc_out:3 * wc_out]
        # Vertical halo: output row r takes t_m1 from row r-1 and t_p1 from row r+1.
        # Image borders (and cross-image wraparound in the flattened M axis) -> zero.
        from_above = jnp.where(is_top, 0.0, pltpu.roll(t_m1, 1, 0))
        from_below = jnp.where(is_bot, 0.0, pltpu.roll(t_p1, m - 1, 0))
        return t_0 + from_above + from_below

    # ---- conv1 (3x3, stride=1, pad=1, no bias) + BN1 + ReLU ----------------------
    h1 = jnp.maximum(conv3x3(x2_bf, a1_ref) + b1_ref[...], 0.0)
    # Dropout(p=0.3) is identity in eval/inference mode.
    # TODO(synk): train-mode stochastic dropout (pltpu.prng_*) not reproduced here.

    # ---- conv2 (3x3, stride=1, pad=1, no bias) + BN2 + residual + ReLU ------------
    y2 = conv3x3(h1.astype(jnp.bfloat16), a2_ref)
    out = jnp.maximum(y2 + b2_ref[...] + x2, 0.0)

    o_ref[...] = out.reshape(nb, h, wc_out).astype(o_ref.dtype)


def _build_row_matrices(k_hwio, w, col_scale):
    """k_hwio: (3, 3, Cin, Cout) conv weights (HWIO), col_scale: (w*Cout,) BN scale.

    Returns (w*Cin, 3*w*Cout): column block kh maps a flattened input row (w*Cin lanes)
    to the contribution of kernel row kh to a flattened output row (w*Cout lanes); the
    three horizontal taps and the zero padding in W are baked into the banded structure,
    and the per-output-channel BN scale is folded into the columns.
    """
    _, _, cin, cout = k_hwio.shape
    mats = []
    for kh in range(3):
        mat = jnp.zeros((w * cin, w * cout), jnp.float32)
        for kw in range(3):
            dw = kw - 1
            # P[wp, wo] = 1 iff input column wp feeds output column wo (wp == wo + dw).
            p = jnp.eye(w, k=-dw, dtype=jnp.float32)
            mat = mat + jnp.kron(p, k_hwio[kh, kw].astype(jnp.float32))
        mats.append(mat * col_scale[None, :])
    return jnp.concatenate(mats, axis=1)


def wide_residual_block_forward(x_nchw, w1_oihw, w2_oihw,
                                gamma1, beta1, mean1, var1,
                                gamma2, beta2, mean2, var2):
    """Pallas implementation. x_nchw: (N, C, H, W) float32. Returns NCHW."""
    n, c, h, w = x_nchw.shape
    cout = w1_oihw.shape[0]
    assert cout == c, "residual add requires in_channels == out_channels"

    # ---- plain-JAX glue: layout conversion, row-matrix weights, BN folding --------
    # NHWC, then flatten (W, C) into the lane dimension (lane-dense when W*C >= 128).
    x = jnp.transpose(x_nchw, (0, 2, 3, 1)).reshape(n, h, w * c)

    k1 = jnp.transpose(w1_oihw, (2, 3, 1, 0))                 # OIHW -> HWIO
    k2 = jnp.transpose(w2_oihw, (2, 3, 1, 0))

    inv1 = gamma1 / jnp.sqrt(var1 + BN_EPS)
    inv2 = gamma2 / jnp.sqrt(var2 + BN_EPS)
    s1 = jnp.tile(inv1, w)                                    # (w*cout,)
    s2 = jnp.tile(inv2, w)
    b1 = jnp.tile(beta1 - mean1 * inv1, w).reshape(1, w * cout)
    b2 = jnp.tile(beta2 - mean2 * inv2, w).reshape(1, w * cout)

    a1 = _build_row_matrices(k1, w, s1).astype(jnp.bfloat16)  # (w*c,    3*w*cout)
    a2 = _build_row_matrices(k2, w, s2).astype(jnp.bfloat16)  # (w*cout, 3*w*cout)

    # Images per grid step: batch images together (amortizes ~0.35us/step overhead)
    # while keeping the per-step matmul M dimension modest.
    nb = 1
    for d in range(1, n + 1):
        if n % d == 0 and d * h <= 256:
            nb = d

    out_flat = pl.pallas_call(
        _wrb_kernel,
        out_shape=jax.ShapeDtypeStruct((n, h, w * cout), x_nchw.dtype),
        grid_spec=pltpu.PrefetchScalarGridSpec(
            num_scalar_prefetch=0,
            grid=(n // nb,),
            in_specs=[
                pl.BlockSpec((nb, h, w * c), lambda i: (i, 0, 0)),
                pl.BlockSpec((w * c, 3 * w * cout), lambda i: (0, 0)),
                pl.BlockSpec((w * cout, 3 * w * cout), lambda i: (0, 0)),
                pl.BlockSpec((1, w * cout), lambda i: (0, 0)),
                pl.BlockSpec((1, w * cout), lambda i: (0, 0)),
            ],
            out_specs=pl.BlockSpec((nb, h, w * cout), lambda i: (i, 0, 0)),
        ),
        compiler_params=pltpu.CompilerParams(
            dimension_semantics=("parallel",)),
    )(x, a1, a2, b1, b2)

    out_nhwc = out_flat.reshape(n, h, w, cout)
    return jnp.transpose(out_nhwc, (0, 3, 1, 2))               # back to NCHW


def reference_forward(x, w1, w2,
                      gamma1, beta1, mean1, var1,
                      gamma2, beta2, mean2, var2):
    """Pure-JAX (XLA) reference in NCHW, eval-mode BN, identity dropout."""
    dn = ('NCHW', 'OIHW', 'NCHW')

    def bn(y, g, b, m, v):
        inv = (g / jnp.sqrt(v + BN_EPS))[None, :, None, None]
        return (y - m[None, :, None, None]) * inv + b[None, :, None, None]

    y = lax.conv_general_dilated(x, w1, (1, 1), ((1, 1), (1, 1)),
                                 dimension_numbers=dn)
    y = jnp.maximum(bn(y, gamma1, beta1, mean1, var1), 0.0)
    y = lax.conv_general_dilated(y, w2, (1, 1), ((1, 1), (1, 1)),
                                 dimension_numbers=dn)
    y = bn(y, gamma2, beta2, mean2, var2)
    return jnp.maximum(y + x, 0.0)


if __name__ == "__main__":
    key = jax.random.PRNGKey(0)
    ks = jax.random.split(key, 12)

    N, C, H, W = 2, 8, 16, 16   # in_channels == out_channels == 8; W*C == 128 lanes

    x = jax.random.normal(ks[0], (N, C, H, W), jnp.float32)
    # Conv2d(C, C, 3, padding=1, bias=False) weights: (out, in, 3, 3)
    w1 = 0.1 * jax.random.normal(ks[1], (C, C, 3, 3), jnp.float32)
    w2 = 0.1 * jax.random.normal(ks[2], (C, C, 3, 3), jnp.float32)
    # BatchNorm2d(C) params + running stats (deterministic, non-trivial)
    gamma1 = 1.0 + 0.1 * jax.random.normal(ks[3], (C,), jnp.float32)
    beta1 = 0.1 * jax.random.normal(ks[4], (C,), jnp.float32)
    mean1 = 0.1 * jax.random.normal(ks[5], (C,), jnp.float32)
    var1 = jax.random.uniform(ks[6], (C,), jnp.float32, 0.5, 1.5)
    gamma2 = 1.0 + 0.1 * jax.random.normal(ks[7], (C,), jnp.float32)
    beta2 = 0.1 * jax.random.normal(ks[8], (C,), jnp.float32)
    mean2 = 0.1 * jax.random.normal(ks[9], (C,), jnp.float32)
    var2 = jax.random.uniform(ks[10], (C,), jnp.float32, 0.5, 1.5)

    out = wide_residual_block_forward(x, w1, w2,
                                      gamma1, beta1, mean1, var1,
                                      gamma2, beta2, mean2, var2)
    out = jax.block_until_ready(out)

    ref = reference_forward(x, w1, w2,
                            gamma1, beta1, mean1, var1,
                            gamma2, beta2, mean2, var2)
    ref = jax.block_until_ready(ref)

    assert out.shape == (N, C, H, W)
    if not bool(jnp.all(jnp.isfinite(out))):
        raise RuntimeError("non-finite values in kernel output")
    max_err = float(jnp.max(jnp.abs(out - ref)))
    if max_err > 5e-2:
        raise RuntimeError(f"kernel/reference mismatch: max abs err = {max_err}")

    print("KERNEL_OK")
</pallas_src>

<mosaic_0001>
module attributes {stable_mosaic.version = 11 : i64} {
  func.func @_wrb_kernel(%arg0: i32, %arg1: memref<2x16x128xf32, #tpu.memory_space<vmem>>, %arg2: memref<128x384xbf16, #tpu.memory_space<vmem>>, %arg3: memref<128x384xbf16, #tpu.memory_space<vmem>>, %arg4: memref<1x128xf32, #tpu.memory_space<vmem>>, %arg5: memref<1x128xf32, #tpu.memory_space<vmem>>, %arg6: memref<2x16x128xf32, #tpu.memory_space<vmem>>) attributes {dimension_semantics = [#tpu.dimension_semantics<parallel>], iteration_bounds = array<i64: 1>, scalar_prefetch = 0 : i64, scratch_operands = 0 : i64, tpu.core_type = #tpu.core_type<tc>, window_params = [{transform_indices = @transform_0, window_bounds = array<i64: 2, 16, 128>}, {pipeline_mode = #tpu.pipeline_mode<synchronous>, transform_indices = @transform_1, window_bounds = array<i64: 128, 384>}, {pipeline_mode = #tpu.pipeline_mode<synchronous>, transform_indices = @transform_2, window_bounds = array<i64: 128, 384>}, {pipeline_mode = #tpu.pipeline_mode<synchronous>, transform_indices = @transform_3, window_bounds = array<i64: 1, 128>}, {pipeline_mode = #tpu.pipeline_mode<synchronous>, transform_indices = @transform_4, window_bounds = array<i64: 1, 128>}, {transform_indices = @transform_5, window_bounds = array<i64: 2, 16, 128>}]} {
    %c0 = arith.constant 0 : index
    %c0_0 = arith.constant 0 : index
    %c0_1 = arith.constant 0 : index
    %0 = vector.load %arg1[%c0, %c0_0, %c0_1] : memref<2x16x128xf32, #tpu.memory_space<vmem>>, vector<2x16x128xf32>
    %1 = vector.shape_cast %0 : vector<2x16x128xf32> to vector<32x128xf32>
    %2 = arith.truncf %1 : vector<32x128xf32> to vector<32x128xbf16>
    %3 = tpu.iota {dimensions = array<i32: 0>} : vector<32x128xi32>
    %c16_i32 = arith.constant 16 : i32
    %c0_i32 = arith.constant 0 : i32
    %4 = arith.cmpi eq, %c16_i32, %c0_i32 : i32
    %c1_i32 = arith.constant 1 : i32
    %5 = arith.select %4, %c1_i32, %c16_i32 : i32
    %6 = vector.broadcast %5 : i32 to vector<32x128xi32>
    %7 = arith.remsi %3, %6 : vector<32x128xi32>
    %c0_i32_2 = arith.constant 0 : i32
    %8 = vector.broadcast %c0_i32_2 : i32 to vector<32x128xi32>
    %9 = arith.cmpi ne, %7, %8 : vector<32x128xi32>
    %c0_i32_3 = arith.constant 0 : i32
    %10 = vector.broadcast %c0_i32_3 : i32 to vector<32x128xi32>
    %11 = arith.cmpi slt, %7, %10 : vector<32x128xi32>
    %c0_i32_4 = arith.constant 0 : i32
    %12 = arith.cmpi slt, %5, %c0_i32_4 : i32
    %13 = vector.broadcast %12 : i1 to vector<32x128xi1>
    %14 = vector.broadcast %13 : vector<32x128xi1> to vector<32x128xi1>
    %15 = arith.xori %11, %14 : vector<32x128xi1>
    %16 = arith.andi %15, %9 : vector<32x128xi1>
    %17 = vector.broadcast %5 : i32 to vector<32x128xi32>
    %18 = arith.addi %7, %17 : vector<32x128xi32>
    %19 = arith.select %16, %18, %7 : vector<32x128xi1>, vector<32x128xi32>
    %c0_i32_5 = arith.constant 0 : i32
    %20 = vector.broadcast %c0_i32_5 : i32 to vector<32x128xi32>
    %21 = arith.cmpi eq, %19, %20 : vector<32x128xi32>
    %c15_i32 = arith.constant 15 : i32
    %22 = vector.broadcast %c15_i32 : i32 to vector<32x128xi32>
    %23 = arith.cmpi eq, %19, %22 : vector<32x128xi32>
    %c0_6 = arith.constant 0 : index
    %c0_7 = arith.constant 0 : index
    %24 = vector.load %arg2[%c0_6, %c0_7] : memref<128x384xbf16, #tpu.memory_space<vmem>>, vector<128x384xbf16>
    %cst = arith.constant dense<0.000000e+00> : vector<32x384xf32>
    %25 = tpu.matmul %2, %24, %cst {dimension_numbers = #tpu.dot_dimension_numbers<[1], [0], [0], [1], [0, 0, 1, 1], [], []>} : vector<32x128xbf16>, vector<128x384xbf16>, vector<32x384xf32> -> vector<32x384xf32>
    %26 = vector.extract_strided_slice %25 {offsets = [0, 0], sizes = [32, 128], strides = [1, 1]} : vector<32x384xf32> to vector<32x128xf32>
    %27 = vector.extract_strided_slice %25 {offsets = [0, 128], sizes = [32, 128], strides = [1, 1]} : vector<32x384xf32> to vector<32x128xf32>
    %28 = vector.extract_strided_slice %25 {offsets = [0, 256], sizes = [32, 128], strides = [1, 1]} : vector<32x384xf32> to vector<32x128xf32>
    %c1_i32_8 = arith.constant 1 : i32
    %29 = tpu.dynamic_rotate %26 by %c1_i32_8 dim 0 : vector<32x128xf32>, i32 -> vector<32x128xf32>
    %cst_9 = arith.constant 0.000000e+00 : f32
    %30 = vector.broadcast %cst_9 : f32 to vector<32x128xf32>
    %31 = arith.select %21, %30, %29 : vector<32x128xi1>, vector<32x128xf32>
    %c31_i32 = arith.constant 31 : i32
    %32 = tpu.dynamic_rotate %28 by %c31_i32 dim 0 : vector<32x128xf32>, i32 -> vector<32x128xf32>
    %cst_10 = arith.constant 0.000000e+00 : f32
    %33 = vector.broadcast %cst_10 : f32 to vector<32x128xf32>
    %34 = arith.select %23, %33, %32 : vector<32x128xi1>, vector<32x128xf32>
    %35 = arith.addf %27, %31 : vector<32x128xf32>
    %36 = arith.addf %35, %34 : vector<32x128xf32>
    %c0_11 = arith.constant 0 : index
    %c0_12 = arith.constant 0 : index
    %37 = vector.load %arg4[%c0_11, %c0_12] : memref<1x128xf32, #tpu.memory_space<vmem>>, vector<1x128xf32>
    %38 = vector.broadcast %37 : vector<1x128xf32> to vector<32x128xf32>
    %39 = arith.addf %36, %38 : vector<32x128xf32>
    %cst_13 = arith.constant 0.000000e+00 : f32
    %40 = vector.broadcast %cst_13 : f32 to vector<32x128xf32>
    %41 = arith.maximumf %39, %40 : vector<32x128xf32>
    %42 = arith.truncf %41 : vector<32x128xf32> to vector<32x128xbf16>
    %c0_14 = arith.constant 0 : index
    %c0_15 = arith.constant 0 : index
    %43 = vector.load %arg3[%c0_14, %c0_15] : memref<128x384xbf16, #tpu.memory_space<vmem>>, vector<128x384xbf16>
    %cst_16 = arith.constant dense<0.000000e+00> : vector<32x384xf32>
    %44 = tpu.matmul %42, %43, %cst_16 {dimension_numbers = #tpu.dot_dimension_numbers<[1], [0], [0], [1], [0, 0, 1, 1], [], []>} : vector<32x128xbf16>, vector<128x384xbf16>, vector<32x384xf32> -> vector<32x384xf32>
    %45 = vector.extract_strided_slice %44 {offsets = [0, 0], sizes = [32, 128], strides = [1, 1]} : vector<32x384xf32> to vector<32x128xf32>
    %46 = vector.extract_strided_slice %44 {offsets = [0, 128], sizes = [32, 128], strides = [1, 1]} : vector<32x384xf32> to vector<32x128xf32>
    %47 = vector.extract_strided_slice %44 {offsets = [0, 256], sizes = [32, 128], strides = [1, 1]} : vector<32x384xf32> to vector<32x128xf32>
    %c1_i32_17 = arith.constant 1 : i32
    %48 = tpu.dynamic_rotate %45 by %c1_i32_17 dim 0 : vector<32x128xf32>, i32 -> vector<32x128xf32>
    %cst_18 = arith.constant 0.000000e+00 : f32
    %49 = vector.broadcast %cst_18 : f32 to vector<32x128xf32>
    %50 = arith.select %21, %49, %48 : vector<32x128xi1>, vector<32x128xf32>
    %c31_i32_19 = arith.constant 31 : i32
    %51 = tpu.dynamic_rotate %47 by %c31_i32_19 dim 0 : vector<32x128xf32>, i32 -> vector<32x128xf32>
    %cst_20 = arith.constant 0.000000e+00 : f32
    %52 = vector.broadcast %cst_20 : f32 to vector<32x128xf32>
    %53 = arith.select %23, %52, %51 : vector<32x128xi1>, vector<32x128xf32>
    %54 = arith.addf %46, %50 : vector<32x128xf32>
    %55 = arith.addf %54, %53 : vector<32x128xf32>
    %c0_21 = arith.constant 0 : index
    %c0_22 = arith.constant 0 : index
    %56 = vector.load %arg5[%c0_21, %c0_22] : memref<1x128xf32, #tpu.memory_space<vmem>>, vector<1x128xf32>
    %57 = vector.broadcast %56 : vector<1x128xf32> to vector<32x128xf32>
    %58 = arith.addf %55, %57 : vector<32x128xf32>
    %59 = arith.addf %58, %1 : vector<32x128xf32>
    %cst_23 = arith.constant 0.000000e+00 : f32
    %60 = vector.broadcast %cst_23 : f32 to vector<32x128xf32>
    %61 = arith.maximumf %59, %60 : vector<32x128xf32>
    %62 = vector.shape_cast %61 : vector<32x128xf32> to vector<2x16x128xf32>
    %c0_24 = arith.constant 0 : index
    %c0_25 = arith.constant 0 : index
    %c0_26 = arith.constant 0 : index
    %63 = vector.load %arg6[%c0_24, %c0_25, %c0_26] : memref<2x16x128xf32, #tpu.memory_space<vmem>>, vector<2x16x128xf32>
    tpu.vector_store %arg6[%c0_24, %c0_25, %c0_26], %62 {strides = array<i32>} : memref<2x16x128xf32, #tpu.memory_space<vmem>>, vector<2x16x128xf32>,
    return
  }
  func.func @transform_0(%arg0: i32) -> (i32, i32, i32) {
    %c0_i32 = arith.constant 0 : i32
    %c0_i32_0 = arith.constant 0 : i32
    %c0_i32_1 = arith.constant 0 : i32
    return %arg0, %c0_i32, %c0_i32_0 : i32, i32, i32
  }
  func.func @transform_1(%arg0: i32) -> (i32, i32) {
    %c0_i32 = arith.constant 0 : i32
    %c0_i32_0 = arith.constant 0 : i32
    %c0_i32_1 = arith.constant 0 : i32
    return %c0_i32, %c0_i32_0 : i32, i32
  }
  func.func @transform_2(%arg0: i32) -> (i32, i32) {
    %c0_i32 = arith.constant 0 : i32
    %c0_i32_0 = arith.constant 0 : i32
    %c0_i32_1 = arith.constant 0 : i32
    return %c0_i32, %c0_i32_0 : i32, i32
  }
  func.func @transform_3(%arg0: i32) -> (i32, i32) {
    %c0_i32 = arith.constant 0 : i32
    %c0_i32_0 = arith.constant 0 : i32
    %c0_i32_1 = arith.constant 0 : i32
    return %c0_i32, %c0_i32_0 : i32, i32
  }
  func.func @transform_4(%arg0: i32) -> (i32, i32) {
    %c0_i32 = arith.constant 0 : i32
    %c0_i32_0 = arith.constant 0 : i32
    %c0_i32_1 = arith.constant 0 : i32
    return %c0_i32, %c0_i32_0 : i32, i32
  }
  func.func @transform_5(%arg0: i32) -> (i32, i32, i32) {
    %c0_i32 = arith.constant 0 : i32
    %c0_i32_0 = arith.constant 0 : i32
    %c0_i32_1 = arith.constant 0 : i32
    return %arg0, %c0_i32, %c0_i32_0 : i32, i32, i32
  }
}

</mosaic_0001>

<llo_original>
// kernel: tpu_custom_call.1
$region0: #{tpu_custom_call.1}
  #allocation0 [shape = 'u32[]', space=smem, size = 0x4, offset = 0x4, fixed_abs, tag = 'smem constant byte address 0x4 - core index']
  #allocation1 [shape = 'u32[144,128]{1,0:T(1,128)}', space=vmem, size = 0x12000, scoped, tag = 'internal scratch']
  %s0 = inlined_call_operand.hbm [shape: f32[2,16,128], index: 0, kind: input, shape index: {}]
  %s1 = inlined_call_operand.hbm [shape: bf16[128,384], index: 1, kind: input, shape index: {}]
  %s2 = inlined_call_operand.hbm [shape: bf16[128,384], index: 2, kind: input, shape index: {}]
  %s3 = inlined_call_operand.vmem [shape: f32[1,128], index: 3, kind: input, shape index: {}]
  %s4 = inlined_call_operand.vmem [shape: f32[1,128], index: 4, kind: input, shape index: {}]
  %s5 = inlined_call_operand.hbm [shape: f32[2,16,128], index: 5, kind: output, shape index: {}]
  %s6 = sld [smem:[#allocation0]]
  $region42: #{tpu_custom_call.1} parent=0
    _
  %s8 = ssub.s32 1, %s6
  %s9 = scalar_select 0, %s8, %s6
  $region1: #{tpu_custom_call.1} parent=0
    #allocation2 [shape = 'u8[16384]{0}', space=vmem, size = 0x4000, scoped, tag = 'input window, operand 0, single buffered']
    #allocation3 [shape = 's32[1]{0}', space=sflag, size = 0x4, scoped, tag = 'scoped memory for tpu_custom_call.1']
    #allocation4 [shape = 's32[1]{0}', space=sflag, size = 0x4, scoped, tag = 'scoped memory for tpu_custom_call.1']
    #allocation5 [shape = 'u8[98304]{0}', space=vmem, size = 0x18000, scoped, tag = 'input window, operand 1, single buffered']
    #allocation6 [shape = 's32[1]{0}', space=sflag, size = 0x4, scoped, tag = 'scoped memory for tpu_custom_call.1']
    #allocation7 [shape = 'u8[98304]{0}', space=vmem, size = 0x18000, scoped, tag = 'input window, operand 2, single buffered']
    #allocation8 [shape = 'u8[16384]{0}', space=vmem, size = 0x4000, scoped, tag = 'output window, operand 0, single buffered']
    %10 = vsyncpa [#allocation3], 0
    %11 = vsyncpa [#allocation6], 0
    %12 = vsyncpa [#allocation4], 0
    // Predicated region
    $region2: #{tpu_custom_call.1} parent=1 // pred_check
      _
    $region3: #{tpu_custom_call.1} parent=1 // pred_check_branch
      %14 = sbr.rel (0) target = $region5
    $region4: #{tpu_custom_call.1} parent=1 // pred_region
      %s16 = ssub.s32 512, 512
      %17 = vsyncadd [#allocation3], %s16
      %s18 = sshll.u32 [#allocation2], 4
      %s19 = int_to_ptr.vmem [resolvable:$true] %s18
      %24 = dma.hbm_to_vmem [thread:$0]  %s0, 512, %s19, [#allocation3], 128, 128, 8
    $region5: #{tpu_custom_call.1} parent=1 // pred_fallthru
      _
    // Predicated region
    $region6: #{tpu_custom_call.1} parent=1 // pred_check
      _
    $region7: #{tpu_custom_call.1} parent=1 // pred_check_branch
      %26 = sbr.rel (0) target = $region9
    $region8: #{tpu_custom_call.1} parent=1 // pred_region
      %s28 = ssub.s32 3072, 3072
      %29 = vsyncadd [#allocation6], %s28
      %s30 = sshll.u32 [#allocation5], 4
      %s31 = int_to_ptr.vmem [resolvable:$true] %s30
      %36 = dma.hbm_to_vmem [thread:$0]  %s1, 3072, %s31, [#allocation6], 192, 192, 12
    $region9: #{tpu_custom_call.1} parent=1 // pred_fallthru
      _
    // Predicated region
    $region10: #{tpu_custom_call.1} parent=1 // pred_check
      _
    $region11: #{tpu_custom_call.1} parent=1 // pred_check_branch
      %38 = sbr.rel (0) target = $region13
    $region12: #{tpu_custom_call.1} parent=1 // pred_region
      %s40 = ssub.s32 3072, 3072
      %41 = vsyncadd [#allocation6], %s40
      %s42 = sshll.u32 [#allocation7], 4
      %s43 = int_to_ptr.vmem [resolvable:$true] %s42
      %48 = dma.hbm_to_vmem [thread:$0]  %s2, 3072, %s43, [#allocation6], 192, 192, 12
    $region13: #{tpu_custom_call.1} parent=1 // pred_fallthru
      _
    // Predicated region
    $region14: #{tpu_custom_call.1} parent=1 // pred_check
      _
    $region15: #{tpu_custom_call.1} parent=1 // pred_check_branch
      %50 = sbr.rel (0) target = $region17
    $region16: #{tpu_custom_call.1} parent=1 // pred_region
      _
    $region17: #{tpu_custom_call.1} parent=1 // pred_fallthru
      _
    // Predicated region
    $region18: #{tpu_custom_call.1} parent=1 // pred_check
      _
    $region19: #{tpu_custom_call.1} parent=1 // pred_check_branch
      %52 = sbr.rel (0) target = $region21
    $region20: #{tpu_custom_call.1} parent=1 // pred_region
      _
    $region21: #{tpu_custom_call.1} parent=1 // pred_fallthru
      _
    // Predicated region
    $region22: #{tpu_custom_call.1} parent=1 // pred_check
      _
    $region23: #{tpu_custom_call.1} parent=1 // pred_check_branch
      %54 = sbr.rel (0) target = $region25
    $region24: #{tpu_custom_call.1} parent=1 // pred_region
      %55 = dma.done [#allocation3], 512
    $region25: #{tpu_custom_call.1} parent=1 // pred_fallthru
      _
    // Predicated region
    $region26: #{tpu_custom_call.1} parent=1 // pred_check
      _
    $region27: #{tpu_custom_call.1} parent=1 // pred_check_branch
      %57 = sbr.rel (0) target = $region29
    $region28: #{tpu_custom_call.1} parent=1 // pred_region
      %58 = dma.done [#allocation6], 3072
    $region29: #{tpu_custom_call.1} parent=1 // pred_fallthru
      _
    // Predicated region
    $region30: #{tpu_custom_call.1} parent=1 // pred_check
      _
    $region31: #{tpu_custom_call.1} parent=1 // pred_check_branch
      %60 = sbr.rel (0) target = $region33
    $region32: #{tpu_custom_call.1} parent=1 // pred_region
      %61 = dma.done [#allocation6], 3072
    $region33: #{tpu_custom_call.1} parent=1 // pred_fallthru
      _
    %v63 = vld [vmem:[#allocation2] sm:$0xff]
    %v64 = vld [vmem:[#allocation2 + $0x8] sm:$0xff]
    %v65 = vld [vmem:[#allocation2 + $0x10] sm:$0xff]
    %v66 = vld [vmem:[#allocation2 + $0x18] sm:$0xff]
    %v67 = vpack.c.bf16 %v64, %v63
    %v68 = vpack.c.bf16 %v66, %v65
    %v69 = vlaneseq
    %v70 = vshrl.u32 %v69, 7
    %v71 = vadd.s32 %v70, 8
    %v72 = vadd.s32 %v70, 16
    %v73 = vadd.s32 %v70, 24
    %vm74 = vcmp.lt.s32.totalorder %v70, 0
    %v75 = vsub.s32 0, %v70
    %v76 = vsel %vm74, %v75, %v70
    %v77 = vshrl.u32 %v76, 4
    %v78 = vand.u32 %v76, 15
    %v79 = vsub.s32 0, %v78
    %v80 = vsel %vm74, %v79, %v78
    %vm81 = vcmp.lt.s32.totalorder %v71, 0
    %v82 = vsub.s32 0, %v71
    %v83 = vsel %vm81, %v82, %v71
    %v84 = vshrl.u32 %v83, 4
    %v85 = vand.u32 %v83, 15
    %v86 = vsub.s32 0, %v85
    %v87 = vsel %vm81, %v86, %v85
    %vm88 = vcmp.lt.s32.totalorder %v72, 0
    %v89 = vsub.s32 0, %v72
    %v90 = vsel %vm88, %v89, %v72
    %v91 = vshrl.u32 %v90, 4
    %v92 = vand.u32 %v90, 15
    %v93 = vsub.s32 0, %v92
    %v94 = vsel %vm88, %v93, %v92
    %vm95 = vcmp.lt.s32.totalorder %v73, 0
    %v96 = vsub.s32 0, %v73
    %v97 = vsel %vm95, %v96, %v73
    %v98 = vshrl.u32 %v97, 4
    %v99 = vand.u32 %v97, 15
    %v100 = vsub.s32 0, %v99
    %v101 = vsel %vm95, %v100, %v99
    %vm102 = vcmp.ne.s32.totalorder %v80, 0
    %vm103 = vcmp.ne.s32.totalorder %v87, 0
    %vm104 = vcmp.ne.s32.totalorder %v94, 0
    %vm105 = vcmp.ne.s32.totalorder %v101, 0
    %vm106 = vcmp.lt.s32.totalorder %v80, 0
    %vm107 = vcmp.lt.s32.totalorder %v87, 0
    %vm108 = vcmp.lt.s32.totalorder %v94, 0
    %vm109 = vcmp.lt.s32.totalorder %v101, 0
    %vm110 = vmand %vm106, %vm102
    %vm111 = vmand %vm107, %vm103
    %vm112 = vmand %vm108, %vm104
    %vm113 = vmand %vm109, %vm105
    %v114 = vadd.s32 %v80, 16
    %v115 = vadd.s32 %v87, 16
    %v116 = vadd.s32 %v94, 16
    %v117 = vadd.s32 %v101, 16
    %v118 = vsel %vm110, %v114, %v80
    %v119 = vsel %vm111, %v115, %v87
    %v120 = vsel %vm112, %v116, %v94
    %v121 = vsel %vm113, %v117, %v101
    %vm122 = vcmp.eq.s32.totalorder %v118, 0
    %vm123 = vcmp.eq.s32.totalorder %v119, 0
    %vm124 = vcmp.eq.s32.totalorder %v120, 0
    %vm125 = vcmp.eq.s32.totalorder %v121, 0
    %vm126 = vcmp.eq.s32.totalorder %v118, 15
    %vm127 = vcmp.eq.s32.totalorder %v119, 15
    %vm128 = vcmp.eq.s32.totalorder %v120, 15
    %vm129 = vcmp.eq.s32.totalorder %v121, 15
    %v130 = vld [vmem:[#allocation5] sm:$0xff]
    %v131 = vld [vmem:[#allocation5 + $0x8] sm:$0xf]
    %v132 = vld [vmem:[#allocation5 + $0xc] sm:$0xff]
    %v133 = vld [vmem:[#allocation5 + $0x14] sm:$0xf]
    %v134 = vld [vmem:[#allocation5 + $0x18] sm:$0xff]
    %v135 = vld [vmem:[#allocation5 + $0x20] sm:$0xf]
    %v136 = vld [vmem:[#allocation5 + $0x24] sm:$0xff]
    %v137 = vld [vmem:[#allocation5 + $0x2c] sm:$0xf]
    %v138 = vld [vmem:[#allocation5 + $0x30] sm:$0xff]
    %v139 = vld [vmem:[#allocation5 + $0x38] sm:$0xf]
    %v140 = vld [vmem:[#allocation5 + $0x3c] sm:$0xff]
    %v141 = vld [vmem:[#allocation5 + $0x44] sm:$0xf]
    %v142 = vld [vmem:[#allocation5 + $0x48] sm:$0xff]
    %v143 = vld [vmem:[#allocation5 + $0x50] sm:$0xf]
    %v144 = vld [vmem:[#allocation5 + $0x54] sm:$0xff]
    %v145 = vld [vmem:[#allocation5 + $0x5c] sm:$0xf]
    %v146 = vld [vmem:[#allocation5 + $0x60] sm:$0xff]
    %v147 = vld [vmem:[#allocation5 + $0x68] sm:$0xf]
    %v148 = vld [vmem:[#allocation5 + $0x6c] sm:$0xff]
    %v149 = vld [vmem:[#allocation5 + $0x74] sm:$0xf]
    %v150 = vld [vmem:[#allocation5 + $0x78] sm:$0xff]
    %v151 = vld [vmem:[#allocation5 + $0x80] sm:$0xf]
    %v152 = vld [vmem:[#allocation5 + $0x84] sm:$0xff]
    %v153 = vld [vmem:[#allocation5 + $0x8c] sm:$0xf]
    %v154 = vld [vmem:[#allocation5 + $0x90] sm:$0xff]
    %v155 = vld [vmem:[#allocation5 + $0x98] sm:$0xf]
    %v156 = vld [vmem:[#allocation5 + $0x9c] sm:$0xff]
    %v157 = vld [vmem:[#allocation5 + $0xa4] sm:$0xf]
    %v158 = vld [vmem:[#allocation5 + $0xa8] sm:$0xff]
    %v159 = vld [vmem:[#allocation5 + $0xb0] sm:$0xf]
    %v160 = vld [vmem:[#allocation5 + $0xb4] sm:$0xff]
    %v161 = vld [vmem:[#allocation5 + $0xbc] sm:$0xf]
    %v194 = vunpack.c.l.b16 %v130
    %v195 = vunpack.c.h.b16 %v130
    %v196 = vunpack.c.l.b16 %v131
    %v197 = vunpack.c.l.b16 %v132
    %v198 = vunpack.c.h.b16 %v132
    %v199 = vunpack.c.l.b16 %v133
    %v200 = vunpack.c.l.b16 %v134
    %v201 = vunpack.c.h.b16 %v134
    %v202 = vunpack.c.l.b16 %v135
    %v203 = vunpack.c.l.b16 %v136
    %v204 = vunpack.c.h.b16 %v136
    %v205 = vunpack.c.l.b16 %v137
    %v206 = vunpack.c.l.b16 %v138
    %v207 = vunpack.c.h.b16 %v138
    %v208 = vunpack.c.l.b16 %v139
    %v209 = vunpack.c.l.b16 %v140
    %v210 = vunpack.c.h.b16 %v140
    %v211 = vunpack.c.l.b16 %v141
    %v212 = vunpack.c.l.b16 %v142
    %v213 = vunpack.c.h.b16 %v142
    %v214 = vunpack.c.l.b16 %v143
    %v215 = vunpack.c.l.b16 %v144
    %v216 = vunpack.c.h.b16 %v144
    %v217 = vunpack.c.l.b16 %v145
    %v218 = vunpack.c.l.b16 %v146
    %v219 = vunpack.c.h.b16 %v146
    %v220 = vunpack.c.l.b16 %v147
    %v221 = vunpack.c.l.b16 %v148
    %v222 = vunpack.c.h.b16 %v148
    %v223 = vunpack.c.l.b16 %v149
    %v224 = vunpack.c.l.b16 %v150
    %v225 = vunpack.c.h.b16 %v150
    %v226 = vunpack.c.l.b16 %v151
    %v227 = vunpack.c.l.b16 %v152
    %v228 = vunpack.c.h.b16 %v152
    %v229 = vunpack.c.l.b16 %v153
    %v230 = vunpack.c.l.b16 %v154
    %v231 = vunpack.c.h.b16 %v154
    %v232 = vunpack.c.l.b16 %v155
    %v233 = vunpack.c.l.b16 %v156
    %v234 = vunpack.c.h.b16 %v156
    %v235 = vunpack.c.l.b16 %v157
    %v236 = vunpack.c.l.b16 %v158
    %v237 = vunpack.c.h.b16 %v158
    %v238 = vunpack.c.l.b16 %v159
    %v239 = vunpack.c.l.b16 %v160
    %v240 = vunpack.c.h.b16 %v160
    %v241 = vunpack.c.l.b16 %v161
    %v242 = vpack.c.b16 %v197, %v194
    %v243 = vpack.c.b16 %v198, %v195
    %v244 = vpack.c.b16 %v199, %v196
    %v245 = vpack.c.b16 %v203, %v200
    %v246 = vpack.c.b16 %v204, %v201
    %v247 = vpack.c.b16 %v205, %v202
    %v248 = vpack.c.b16 %v209, %v206
    %v249 = vpack.c.b16 %v210, %v207
    %v250 = vpack.c.b16 %v211, %v208
    %v251 = vpack.c.b16 %v215, %v212
    %v252 = vpack.c.b16 %v216, %v213
    %v253 = vpack.c.b16 %v217, %v214
    %v254 = vpack.c.b16 %v221, %v218
    %v255 = vpack.c.b16 %v222, %v219
    %v256 = vpack.c.b16 %v223, %v220
    %v257 = vpack.c.b16 %v227, %v224
    %v258 = vpack.c.b16 %v228, %v225
    %v259 = vpack.c.b16 %v229, %v226
    %v260 = vpack.c.b16 %v233, %v230
    %v261 = vpack.c.b16 %v234, %v231
    %v262 = vpack.c.b16 %v235, %v232
    %v263 = vpack.c.b16 %v239, %v236
    %v264 = vpack.c.b16 %v240, %v237
    %v265 = vpack.c.b16 %v241, %v238
    %290 = vmatprep.subr.bf16.mxu0 %v264
    %291 = vmatpush1.bf16.msra.mxu0 %v263
    %292 = vmatprep.subr.bf16.mxu0 %v261
    %293 = vmatpush1.bf16.msra.mxu0 %v260
    %294 = vmatprep.subr.bf16.mxu0 %v258
    %295 = vmatpush1.bf16.msra.mxu0 %v257
    %296 = vmatprep.subr.bf16.mxu0 %v255
    %297 = vmatpush1.bf16.msra.mxu0 %v254
    %298 = vmatprep.subr.bf16.mxu0 %v252
    %299 = vmatpush1.bf16.msra.mxu0 %v251
    %300 = vmatprep.subr.bf16.mxu0 %v249
    %301 = vmatpush1.bf16.msra.mxu0 %v248
    %302 = vmatprep.subr.bf16.mxu0 %v246
    %303 = vmatpush1.bf16.msra.mxu0 %v245
    %304 = vmatprep.subr.bf16.mxu0 %v243
    %305 = vmatpush1.bf16.msra.mxu0 %v242
    %306 = vmatprep.subr.bf16.mxu0 0
    %307 = vmatpush2.bf16.msra.mxu0 0
    %308 = vmatprep.subr.bf16.mxu0 0
    %309 = vmatpush2.bf16.msra.mxu0 0
    %310 = vmatprep.subr.bf16.mxu0 0
    %311 = vmatpush2.bf16.msra.mxu0 0
    %312 = vmatprep.subr.bf16.mxu0 0
    %313 = vmatpush2.bf16.msra.mxu0 0
    %314 = vmatprep.subr.bf16.mxu0 0
    %315 = vmatpush2.bf16.msra.mxu0 0
    %316 = vmatprep.subr.bf16.mxu0 0
    %317 = vmatpush2.bf16.msra.mxu0 0
    %318 = vmatprep.subr.bf16.mxu0 0
    %319 = vmatpush2.bf16.msra.mxu0 0
    %320 = vmatprep.subr.bf16.mxu0 0
    %321 = vmatpush2.bf16.msra.mxu0 0
    %322 = vmatprep.mubr.bf16.mxu0 0
    %323 = vmatmul.mubr.bf16.gmra.mxu0 %v67
    %v324 = vpop.f32.mrf.mxu0
    %v325 = vadd.f32 0.0, %v324
    %v326 = vpop.f32.mrf.mxu0
    %v327 = vadd.f32 0.0, %v326
    %v328 = vpop.f32.mrf.mxu0
    %v329 = vadd.f32 0.0, %v328
    %v330 = vpop.f32.mrf.mxu0
    %v331 = vadd.f32 0.0, %v330
    %332 = vmatprep.mubr.bf16.mxu0 0
    %333 = vmatmul.mubr.bf16.gmra.mxu0 %v68
    %v334 = vpop.f32.mrf.mxu0
    %v335 = vadd.f32 0.0, %v334
    %v336 = vpop.f32.mrf.mxu0
    %v337 = vadd.f32 0.0, %v336
    %v338 = vpop.f32.mrf.mxu0
    %v339 = vadd.f32 0.0, %v338
    %v340 = vpop.f32.mrf.mxu0
    %v341 = vadd.f32 0.0, %v340
    %342 = vdwg.mxu0
    %343 = vmatprep.subr.bf16.mxu0 0
    %344 = vmatpush1.bf16.msra.mxu0 %v265
    %345 = vmatprep.subr.bf16.mxu0 0
    %346 = vmatpush1.bf16.msra.mxu0 %v262
    %347 = vmatprep.subr.bf16.mxu0 0
    %348 = vmatpush1.bf16.msra.mxu0 %v259
    %349 = vmatprep.subr.bf16.mxu0 0
    %350 = vmatpush1.bf16.msra.mxu0 %v256
    %351 = vmatprep.subr.bf16.mxu0 0
    %352 = vmatpush1.bf16.msra.mxu0 %v253
    %353 = vmatprep.subr.bf16.mxu0 0
    %354 = vmatpush1.bf16.msra.mxu0 %v250
    %355 = vmatprep.subr.bf16.mxu0 0
    %356 = vmatpush1.bf16.msra.mxu0 %v247
    %357 = vmatprep.subr.bf16.mxu0 0
    %358 = vmatpush1.bf16.msra.mxu0 %v244
    %359 = vmatprep.subr.bf16.mxu0 0
    %360 = vmatpush2.bf16.msra.mxu0 0
    %361 = vmatprep.subr.bf16.mxu0 0
    %362 = vmatpush2.bf16.msra.mxu0 0
    %363 = vmatprep.subr.bf16.mxu0 0
    %364 = vmatpush2.bf16.msra.mxu0 0
    %365 = vmatprep.subr.bf16.mxu0 0
    %366 = vmatpush2.bf16.msra.mxu0 0
    %367 = vmatprep.subr.bf16.mxu0 0
    %368 = vmatpush2.bf16.msra.mxu0 0
    %369 = vmatprep.subr.bf16.mxu0 0
    %370 = vmatpush2.bf16.msra.mxu0 0
    %371 = vmatprep.subr.bf16.mxu0 0
    %372 = vmatpush2.bf16.msra.mxu0 0
    %373 = vmatprep.subr.bf16.mxu0 0
    %374 = vmatpush2.bf16.msra.mxu0 0
    %375 = vmatprep.mubr.bf16.mxu0 0
    %376 = vmatmul.mubr.bf16.gmra.mxu0 %v67
    %v377 = vpop.f32.mrf.mxu0
    %v378 = vadd.f32 0.0, %v377
    %v379 = vpop.f32.mrf.mxu0
    %v380 = vpop.f32.mrf.mxu0
    %v381 = vadd.f32 0.0, %v380
    %v382 = vpop.f32.mrf.mxu0
    %383 = vmatprep.mubr.bf16.mxu0 0
    %384 = vmatmul.mubr.bf16.gmra.mxu0 %v68
    %v385 = vpop.f32.mrf.mxu0
    %v386 = vadd.f32 0.0, %v385
    %v387 = vpop.f32.mrf.mxu0
    %v388 = vpop.f32.mrf.mxu0
    %v389 = vadd.f32 0.0, %v388
    %v390 = vpop.f32.mrf.mxu0
    %391 = vdwg.mxu0
    %v392 = vrot.slane %v325, 7
    %v393 = vrot.slane %v329, 7
    %v394 = vrot.slane %v335, 7
    %v395 = vrot.slane %v339, 7
    %vm396 = vcmp.lt.s32.totalorder %v70, 1
    %v397 = vsel %vm396, %v394, %v395
    %v398 = vsel %vm396, %v393, %v394
    %v399 = vsel %vm396, %v392, %v393
    %v400 = vsel %vm396, %v395, %v392
    %v401 = vsel %vm122, 0.0, %v400
    %v402 = vsel %vm123, 0.0, %v399
    %v403 = vsel %vm124, 0.0, %v398
    %v404 = vsel %vm125, 0.0, %v397
    %v405 = vrot.slane %v378, 1
    %v406 = vrot.slane %v381, 1
    %v407 = vrot.slane %v386, 1
    %v408 = vrot.slane %v389, 1
    %vm409 = vcmp.lt.s32.totalorder %v70, 7
    %v410 = vsel %vm409, %v407, %v408
    %v411 = vsel %vm409, %v406, %v407
    %v412 = vsel %vm409, %v405, %v406
    %v413 = vsel %vm409, %v408, %v405
    %v414 = vsel %vm126, 0.0, %v412
    %v415 = vsel %vm127, 0.0, %v411
    %v416 = vsel %vm128, 0.0, %v410
    %v417 = vsel %vm129, 0.0, %v413
    %v418 = vadd.f32 %v327, %v401
    %v419 = vadd.f32 %v331, %v402
    %v420 = vadd.f32 %v337, %v403
    %v421 = vadd.f32 %v341, %v404
    %v422 = vadd.f32 %v418, %v414
    %v423 = vadd.f32 %v419, %v415
    %v424 = vadd.f32 %v420, %v416
    %v425 = vadd.f32 %v421, %v417
    %v426 = vld [vmem:[%s3] sm:$0x1]
    %v428 = vlaneseq
    %v429 = vshrl.u32 %v428, 7
    %v430 = vsub.s32 0, %v429
    %v431 = vrot.slane %v426, %v430
    %v433 = vadd.f32 %v422, %v431
    %v434 = vadd.f32 %v423, %v431
    %v435 = vadd.f32 %v424, %v431
    %v436 = vadd.f32 %v425, %v431
    %v437 = vmax.f32 %v433, 0.0
    %v438 = vmax.f32 %v434, 0.0
    %v439 = vmax.f32 %v435, 0.0
    %v440 = vmax.f32 %v436, 0.0
    %v441 = vpack.c.bf16 %v438, %v437
    %v442 = vpack.c.bf16 %v440, %v439
    %v443 = vld [vmem:[#allocation7] sm:$0xff]
    %v444 = vld [vmem:[#allocation7 + $0x8] sm:$0xf]
    %v445 = vld [vmem:[#allocation7 + $0xc] sm:$0xff]
    %v446 = vld [vmem:[#allocation7 + $0x14] sm:$0xf]
    %v447 = vld [vmem:[#allocation7 + $0x18] sm:$0xff]
    %v448 = vld [vmem:[#allocation7 + $0x20] sm:$0xf]
    %v449 = vld [vmem:[#allocation7 + $0x24] sm:$0xff]
    %v450 = vld [vmem:[#allocation7 + $0x2c] sm:$0xf]
    %v451 = vld [vmem:[#allocation7 + $0x30] sm:$0xff]
    %v452 = vld [vmem:[#allocation7 + $0x38] sm:$0xf]
    %v453 = vld [vmem:[#allocation7 + $0x3c] sm:$0xff]
    %v454 = vld [vmem:[#allocation7 + $0x44] sm:$0xf]
    %v455 = vld [vmem:[#allocation7 + $0x48] sm:$0xff]
    %v456 = vld [vmem:[#allocation7 + $0x50] sm:$0xf]
    %v457 = vld [vmem:[#allocation7 + $0x54] sm:$0xff]
    %v458 = vld [vmem:[#allocation7 + $0x5c] sm:$0xf]
    %v459 = vld [vmem:[#allocation7 + $0x60] sm:$0xff]
    %v460 = vld [vmem:[#allocation7 + $0x68] sm:$0xf]
    %v461 = vld [vmem:[#allocation7 + $0x6c] sm:$0xff]
    %v462 = vld [vmem:[#allocation7 + $0x74] sm:$0xf]
    %v463 = vld [vmem:[#allocation7 + $0x78] sm:$0xff]
    %v464 = vld [vmem:[#allocation7 + $0x80] sm:$0xf]
    %v465 = vld [vmem:[#allocation7 + $0x84] sm:$0xff]
    %v466 = vld [vmem:[#allocation7 + $0x8c] sm:$0xf]
    %v467 = vld [vmem:[#allocation7 + $0x90] sm:$0xff]
    %v468 = vld [vmem:[#allocation7 + $0x98] sm:$0xf]
    %v469 = vld [vmem:[#allocation7 + $0x9c] sm:$0xff]
    %v470 = vld [vmem:[#allocation7 + $0xa4] sm:$0xf]
    %v471 = vld [vmem:[#allocation7 + $0xa8] sm:$0xff]
    %v472 = vld [vmem:[#allocation7 + $0xb0] sm:$0xf]
    %v473 = vld [vmem:[#allocation7 + $0xb4] sm:$0xff]
    %v474 = vld [vmem:[#allocation7 + $0xbc] sm:$0xf]
    %v507 = vunpack.c.l.b16 %v443
    %v508 = vunpack.c.h.b16 %v443
    %v509 = vunpack.c.l.b16 %v444
    %v510 = vunpack.c.l.b16 %v445
    %v511 = vunpack.c.h.b16 %v445
    %v512 = vunpack.c.l.b16 %v446
    %v513 = vunpack.c.l.b16 %v447
    %v514 = vunpack.c.h.b16 %v447
    %v515 = vunpack.c.l.b16 %v448
    %v516 = vunpack.c.l.b16 %v449
    %v517 = vunpack.c.h.b16 %v449
    %v518 = vunpack.c.l.b16 %v450
    %v519 = vunpack.c.l.b16 %v451
    %v520 = vunpack.c.h.b16 %v451
    %v521 = vunpack.c.l.b16 %v452
    %v522 = vunpack.c.l.b16 %v453
    %v523 = vunpack.c.h.b16 %v453
    %v524 = vunpack.c.l.b16 %v454
    %v525 = vunpack.c.l.b16 %v455
    %v526 = vunpack.c.h.b16 %v455
    %v527 = vunpack.c.l.b16 %v456
    %v528 = vunpack.c.l.b16 %v457
    %v529 = vunpack.c.h.b16 %v457
    %v530 = vunpack.c.l.b16 %v458
    %v531 = vunpack.c.l.b16 %v459
    %v532 = vunpack.c.h.b16 %v459
    %v533 = vunpack.c.l.b16 %v460
    %v534 = vunpack.c.l.b16 %v461
    %v535 = vunpack.c.h.b16 %v461
    %v536 = vunpack.c.l.b16 %v462
    %v537 = vunpack.c.l.b16 %v463
    %v538 = vunpack.c.h.b16 %v463
    %v539 = vunpack.c.l.b16 %v464
    %v540 = vunpack.c.l.b16 %v465
    %v541 = vunpack.c.h.b16 %v465
    %v542 = vunpack.c.l.b16 %v466
    %v543 = vunpack.c.l.b16 %v467
    %v544 = vunpack.c.h.b16 %v467
    %v545 = vunpack.c.l.b16 %v468
    %v546 = vunpack.c.l.b16 %v469
    %v547 = vunpack.c.h.b16 %v469
    %v548 = vunpack.c.l.b16 %v470
    %v549 = vunpack.c.l.b16 %v471
    %v550 = vunpack.c.h.b16 %v471
    %v551 = vunpack.c.l.b16 %v472
    %v552 = vunpack.c.l.b16 %v473
    %v553 = vunpack.c.h.b16 %v473
    %v554 = vunpack.c.l.b16 %v474
    %v555 = vpack.c.b16 %v510, %v507
    %v556 = vpack.c.b16 %v511, %v508
    %v557 = vpack.c.b16 %v512, %v509
    %v558 = vpack.c.b16 %v516, %v513
    %v559 = vpack.c.b16 %v517, %v514
    %v560 = vpack.c.b16 %v518, %v515
    %v561 = vpack.c.b16 %v522, %v519
    %v562 = vpack.c.b16 %v523, %v520
    %v563 = vpack.c.b16 %v524, %v521
    %v564 = vpack.c.b16 %v528, %v525
    %v565 = vpack.c.b16 %v529, %v526
    %v566 = vpack.c.b16 %v530, %v527
    %v567 = vpack.c.b16 %v534, %v531
    %v568 = vpack.c.b16 %v535, %v532
    %v569 = vpack.c.b16 %v536, %v533
    %v570 = vpack.c.b16 %v540, %v537
    %v571 = vpack.c.b16 %v541, %v538
    %v572 = vpack.c.b16 %v542, %v539
    %v573 = vpack.c.b16 %v546, %v543
    %v574 = vpack.c.b16 %v547, %v544
    %v575 = vpack.c.b16 %v548, %v545
    %v576 = vpack.c.b16 %v552, %v549
    %v577 = vpack.c.b16 %v553, %v550
    %v578 = vpack.c.b16 %v554, %v551
    %603 = vmatprep.subr.bf16.mxu0 %v577
    %604 = vmatpush1.bf16.msra.mxu0 %v576
    %605 = vmatprep.subr.bf16.mxu0 %v574
    %606 = vmatpush1.bf16.msra.mxu0 %v573
    %607 = vmatprep.subr.bf16.mxu0 %v571
    %608 = vmatpush1.bf16.msra.mxu0 %v570
    %609 = vmatprep.subr.bf16.mxu0 %v568
    %610 = vmatpush1.bf16.msra.mxu0 %v567
    %611 = vmatprep.subr.bf16.mxu0 %v565
    %612 = vmatpush1.bf16.msra.mxu0 %v564
    %613 = vmatprep.subr.bf16.mxu0 %v562
    %614 = vmatpush1.bf16.msra.mxu0 %v561
    %615 = vmatprep.subr.bf16.mxu0 %v559
    %616 = vmatpush1.bf16.msra.mxu0 %v558
    %617 = vmatprep.subr.bf16.mxu0 %v556
    %618 = vmatpush1.bf16.msra.mxu0 %v555
    %619 = vmatprep.subr.bf16.mxu0 0
    %620 = vmatpush2.bf16.msra.mxu0 0
    %621 = vmatprep.subr.bf16.mxu0 0
    %622 = vmatpush2.bf16.msra.mxu0 0
    %623 = vmatprep.subr.bf16.mxu0 0
    %624 = vmatpush2.bf16.msra.mxu0 0
    %625 = vmatprep.subr.bf16.mxu0 0
    %626 = vmatpush2.bf16.msra.mxu0 0
    %627 = vmatprep.subr.bf16.mxu0 0
    %628 = vmatpush2.bf16.msra.mxu0 0
    %629 = vmatprep.subr.bf16.mxu0 0
    %630 = vmatpush2.bf16.msra.mxu0 0
    %631 = vmatprep.subr.bf16.mxu0 0
    %632 = vmatpush2.bf16.msra.mxu0 0
    %633 = vmatprep.subr.bf16.mxu0 0
    %634 = vmatpush2.bf16.msra.mxu0 0
    %635 = vmatprep.mubr.bf16.mxu0 0
    %636 = vmatmul.mubr.bf16.gmra.mxu0 %v441
    %v637 = vpop.f32.mrf.mxu0
    %v638 = vadd.f32 0.0, %v637
    %v639 = vpop.f32.mrf.mxu0
    %v640 = vadd.f32 0.0, %v639
    %v641 = vpop.f32.mrf.mxu0
    %v642 = vadd.f32 0.0, %v641
    %v643 = vpop.f32.mrf.mxu0
    %v644 = vadd.f32 0.0, %v643
    %645 = vmatprep.mubr.bf16.mxu0 0
    %646 = vmatmul.mubr.bf16.gmra.mxu0 %v442
    %v647 = vpop.f32.mrf.mxu0
    %v648 = vadd.f32 0.0, %v647
    %v649 = vpop.f32.mrf.mxu0
    %v650 = vadd.f32 0.0, %v649
    %v651 = vpop.f32.mrf.mxu0
    %v652 = vadd.f32 0.0, %v651
    %v653 = vpop.f32.mrf.mxu0
    %v654 = vadd.f32 0.0, %v653
    %655 = vdwg.mxu0
    %656 = vmatprep.subr.bf16.mxu0 0
    %657 = vmatpush1.bf16.msra.mxu0 %v578
    %658 = vmatprep.subr.bf16.mxu0 0
    %659 = vmatpush1.bf16.msra.mxu0 %v575
    %660 = vmatprep.subr.bf16.mxu0 0
    %661 = vmatpush1.bf16.msra.mxu0 %v572
    %662 = vmatprep.subr.bf16.mxu0 0
    %663 = vmatpush1.bf16.msra.mxu0 %v569
    %664 = vmatprep.subr.bf16.mxu0 0
    %665 = vmatpush1.bf16.msra.mxu0 %v566
    %666 = vmatprep.subr.bf16.mxu0 0
    %667 = vmatpush1.bf16.msra.mxu0 %v563
    %668 = vmatprep.subr.bf16.mxu0 0
    %669 = vmatpush1.bf16.msra.mxu0 %v560
    %670 = vmatprep.subr.bf16.mxu0 0
    %671 = vmatpush1.bf16.msra.mxu0 %v557
    %672 = vmatprep.subr.bf16.mxu0 0
    %673 = vmatpush2.bf16.msra.mxu0 0
    %674 = vmatprep.subr.bf16.mxu0 0
    %675 = vmatpush2.bf16.msra.mxu0 0
    %676 = vmatprep.subr.bf16.mxu0 0
    %677 = vmatpush2.bf16.msra.mxu0 0
    %678 = vmatprep.subr.bf16.mxu0 0
    %679 = vmatpush2.bf16.msra.mxu0 0
    %680 = vmatprep.subr.bf16.mxu0 0
    %681 = vmatpush2.bf16.msra.mxu0 0
    %682 = vmatprep.subr.bf16.mxu0 0
    %683 = vmatpush2.bf16.msra.mxu0 0
    %684 = vmatprep.subr.bf16.mxu0 0
    %685 = vmatpush2.bf16.msra.mxu0 0
    %686 = vmatprep.subr.bf16.mxu0 0
    %687 = vmatpush2.bf16.msra.mxu0 0
    %688 = vmatprep.mubr.bf16.mxu0 0
    %689 = vmatmul.mubr.bf16.gmra.mxu0 %v441
    %v690 = vpop.f32.mrf.mxu0
    %v691 = vadd.f32 0.0, %v690
    %v692 = vpop.f32.mrf.mxu0
    %v693 = vpop.f32.mrf.mxu0
    %v694 = vadd.f32 0.0, %v693
    %v695 = vpop.f32.mrf.mxu0
    %696 = vmatprep.mubr.bf16.mxu0 0
    %697 = vmatmul.mubr.bf16.gmra.mxu0 %v442
    %v698 = vpop.f32.mrf.mxu0
    %v699 = vadd.f32 0.0, %v698
    %v700 = vpop.f32.mrf.mxu0
    %v701 = vpop.f32.mrf.mxu0
    %v702 = vadd.f32 0.0, %v701
    %v703 = vpop.f32.mrf.mxu0
    %704 = vdwg.mxu0
    %v705 = vrot.slane %v638, 7
    %v706 = vrot.slane %v642, 7
    %v707 = vrot.slane %v648, 7
    %v708 = vrot.slane %v652, 7
    %v709 = vsel %vm396, %v707, %v708
    %v710 = vsel %vm396, %v706, %v707
    %v711 = vsel %vm396, %v705, %v706
    %v712 = vsel %vm396, %v708, %v705
    %v713 = vsel %vm122, 0.0, %v712
    %v714 = vsel %vm123, 0.0, %v711
    %v715 = vsel %vm124, 0.0, %v710
    %v716 = vsel %vm125, 0.0, %v709
    %v717 = vrot.slane %v691, 1
    %v718 = vrot.slane %v694, 1
    %v719 = vrot.slane %v699, 1
    %v720 = vrot.slane %v702, 1
    %v721 = vsel %vm409, %v719, %v720
    %v722 = vsel %vm409, %v718, %v719
    %v723 = vsel %vm409, %v717, %v718
    %v724 = vsel %vm409, %v720, %v717
    %v725 = vsel %vm126, 0.0, %v723
    %v726 = vsel %vm127, 0.0, %v722
    %v727 = vsel %vm128, 0.0, %v721
    %v728 = vsel %vm129, 0.0, %v724
    %v729 = vadd.f32 %v640, %v713
    %v730 = vadd.f32 %v644, %v714
    %v731 = vadd.f32 %v650, %v715
    %v732 = vadd.f32 %v654, %v716
    %v733 = vadd.f32 %v729, %v725
    %v734 = vadd.f32 %v730, %v726
    %v735 = vadd.f32 %v731, %v727
    %v736 = vadd.f32 %v732, %v728
    %v737 = vld [vmem:[%s4] sm:$0x1]
    %v739 = vlaneseq
    %v740 = vshrl.u32 %v739, 7
    %v741 = vsub.s32 0, %v740
    %v742 = vrot.slane %v737, %v741
    %v744 = vadd.f32 %v733, %v742
    %v745 = vadd.f32 %v734, %v742
    %v746 = vadd.f32 %v735, %v742
    %v747 = vadd.f32 %v736, %v742
    %v748 = vadd.f32 %v744, %v63
    %v749 = vadd.f32 %v745, %v64
    %v750 = vadd.f32 %v746, %v65
    %v751 = vadd.f32 %v747, %v66
    %v752 = vmax.f32 %v748, 0.0
    %v753 = vmax.f32 %v749, 0.0
    %v754 = vmax.f32 %v750, 0.0
    %v755 = vmax.f32 %v751, 0.0
    %756 = vst [vmem:[#allocation8] sm:$0xff] %v752
    %757 = vst [vmem:[#allocation8 + $0x8] sm:$0xff] %v753
    %758 = vst [vmem:[#allocation8 + $0x10] sm:$0xff] %v754
    %759 = vst [vmem:[#allocation8 + $0x18] sm:$0xff] %v755
    // Predicated region
    $region34: #{tpu_custom_call.1} parent=1 // pred_check
      _
    $region35: #{tpu_custom_call.1} parent=1 // pred_check_branch
      %761 = sbr.rel (0) target = $region37
    $region36: #{tpu_custom_call.1} parent=1 // pred_region
      %s763 = ssub.s32 512, 512
      %764 = vsyncadd [#allocation4], %s763
      %s765 = sshll.u32 [#allocation8], 4
      %s766 = int_to_ptr.vmem [resolvable:$true] %s765
      %771 = dma.vmem_to_hbm [thread:$0]  %s766, 512, %s5, [#allocation4], 128, 128, 8
    $region37: #{tpu_custom_call.1} parent=1 // pred_fallthru
      _
    // Predicated region
    $region38: #{tpu_custom_call.1} parent=1 // pred_check
      _
    $region39: #{tpu_custom_call.1} parent=1 // pred_check_branch
      %773 = sbr.rel (0) target = $region41
    $region40: #{tpu_custom_call.1} parent=1 // pred_region
      %774 = dma.done [#allocation4], 512
    $region41: #{tpu_custom_call.1} parent=1 // pred_fallthru
      _
    %775 = vsyncpa [#allocation3], 1
    %776 = vsyncpa [#allocation6], 1
    %777 = vsyncpa [#allocation4], 1

</llo_original>
